<compile_context>
chip_gen: v7x
topology: tpu7x:2x2x1
jax: 0.10.0
libtpu: 0.0.40
codegen_flags: <defaults>
</compile_context>

<pallas_src>
import functools

import jax
import jax.numpy as jnp
from jax.experimental import pallas as pl
from jax.experimental.pallas import tpu as pltpu


def _round_up(x: int, m: int) -> int:
    return ((x + m - 1) // m) * m


def _fused_mlp_kernel(*refs, n_layers, out_dims, final_activation):
    """Whole MLP in one kernel invocation.

    refs = (x_ref, w_ref_0, ..., w_ref_{L-1}, b_ref, o_ref)
      x_ref : (TB, din)         activation tile, true feature width, f32
      w_ref : (din_i, dout_i)   bf16 weights, full-array VMEM-resident blocks
      b_ref : (L, max_dout)     all f32 biases stacked (one small DMA)
      o_ref : (TB, dout_last)   output tile at its true width, f32
    """
    x_ref = refs[0]
    w_refs = refs[1:1 + n_layers]
    b_ref = refs[1 + n_layers]
    o_ref = refs[2 + n_layers]

    h = x_ref[...].astype(jnp.float32)
    for li in range(n_layers):
        dout = out_dims[li]
        w = w_refs[li][...]                                   # bf16 (din_i, dout_i)
        b = b_ref[li:li + 1, :dout]                           # f32  (1, dout_i)
        h = jnp.dot(h.astype(jnp.bfloat16), w,
                    preferred_element_type=jnp.float32) + b   # f32 accumulate
        if (li < n_layers - 1) or final_activation:           # hidden layers: ReLU
            h = jnp.maximum(h, 0.0)
    o_ref[...] = h.astype(o_ref.dtype)


def fused_mlp(x, weights, biases, *, out_dims, final_activation, max_tb=2048):
    """Run the fused MLP.  x: (B, din) f32, weights: list of bf16 (din_i, dout_i)."""
    n_layers = len(weights)
    B, din = x.shape
    d_last = out_dims[-1]

    kernel = functools.partial(
        _fused_mlp_kernel,
        n_layers=n_layers,
        out_dims=tuple(out_dims),
        final_activation=final_activation,
    )

    b8 = _round_up(B, 8)
    n_tiles = -(-b8 // max_tb)

    if n_tiles == 1:
        # Single batch tile: no grid, no pipeline bookkeeping, no padding at
        # all; everything sits in VMEM for the one kernel invocation.
        vmem = pl.BlockSpec(memory_space=pltpu.MemorySpace.VMEM)
        return pl.pallas_call(
            kernel,
            out_shape=jax.ShapeDtypeStruct((B, d_last), jnp.float32),
            in_specs=[vmem] * (1 + n_layers + 1),
            out_specs=vmem,
        )(x, *weights, biases)

    # Large batch: tile only the batch axis with an adaptively sized tile so
    # padding waste stays below one sublane row per tile.  Weights/biases use a
    # constant block index -> fetched once, VMEM-resident across all tiles.
    tb = _round_up(-(-b8 // n_tiles), 8)
    b_pad = n_tiles * tb
    if b_pad != B:
        x = jnp.zeros((b_pad, din), x.dtype).at[:B].set(x)

    in_specs = [pl.BlockSpec((tb, din), lambda i: (i, 0))]
    for w in weights:
        in_specs.append(pl.BlockSpec(w.shape, lambda i: (0, 0)))
    in_specs.append(pl.BlockSpec(biases.shape, lambda i: (0, 0)))
    out_specs = pl.BlockSpec((tb, d_last), lambda i: (i, 0))

    out = pl.pallas_call(
        kernel,
        out_shape=jax.ShapeDtypeStruct((b_pad, d_last), jnp.float32),
        grid=(n_tiles,),
        in_specs=in_specs,
        out_specs=out_specs,
        compiler_params=pltpu.CompilerParams(
            dimension_semantics=("parallel",),
        ),
    )(x, *weights, biases)
    return out[:B]


class CellPallas:
    """JAX/Pallas equivalent of the PyTorch `Cell` MLP."""

    SUBLANE = 8
    MAX_BATCH_TILE = 2048   # rows per batch tile; fits easily in VMEM at these dims

    def __init__(self, dimensions, final_activation=False, key=None):
        self.dimensions = [int(d) for d in dimensions]
        self.size = len(self.dimensions)
        self.final_activation = final_activation
        self.n_layers = self.size - 1
        if key is None:
            key = jax.random.PRNGKey(0)

        max_out = max(self.dimensions[1:])

        # nn.Linear-style init: U(-1/sqrt(fan_in), +1/sqrt(fan_in)).
        self.weights_f32 = []     # (din, dout) f32 (master copies)
        self.weights_bf16 = []    # (din, dout) bf16 (what the kernel consumes)
        self.biases_f32 = []      # (dout,) f32
        bias_rows = []
        for i in range(self.n_layers):
            din, dout = self.dimensions[i], self.dimensions[i + 1]
            key, kw, kb = jax.random.split(key, 3)
            bound = 1.0 / float(din) ** 0.5
            w = jax.random.uniform(kw, (din, dout), jnp.float32, -bound, bound)
            b = jax.random.uniform(kb, (dout,), jnp.float32, -bound, bound)
            self.weights_f32.append(w)
            self.weights_bf16.append(w.astype(jnp.bfloat16))
            self.biases_f32.append(b)
            bias_rows.append(jnp.zeros((max_out,), jnp.float32).at[:dout].set(b))

        # All biases stacked -> one small DMA instead of one per layer.
        self.biases_stacked = jnp.stack(bias_rows, axis=0)   # (L, max_out) f32

    def __call__(self, x):
        squeeze = x.ndim == 1
        if squeeze:
            x = x[None, :]
        B, din = x.shape
        assert din == self.dimensions[0]

        out = fused_mlp(
            x.astype(jnp.float32),
            self.weights_bf16,
            self.biases_stacked,
            out_dims=self.dimensions[1:],
            final_activation=self.final_activation,
            max_tb=self.MAX_BATCH_TILE,
        )
        return out[0] if squeeze else out

    def reference(self, x):
        """Pure-JAX reference mirroring the kernel math (bf16 weights, f32 acc)."""
        squeeze = x.ndim == 1
        if squeeze:
            x = x[None, :]
        h = x.astype(jnp.float32)
        for li in range(self.n_layers):
            h = jnp.dot(h.astype(jnp.bfloat16), self.weights_bf16[li],
                        preferred_element_type=jnp.float32) + self.biases_f32[li]
            if (li < self.n_layers - 1) or self.final_activation:
                h = jnp.maximum(h, 0.0)
        return h[0] if squeeze else h


if __name__ == "__main__":
    # dimensions: [dim(input), hidden..., dim(output)]
    dimensions = [4, 32, 32, 8]

    key = jax.random.PRNGKey(0)
    k_params, k_small, k_big, k_one = jax.random.split(key, 4)

    cell = CellPallas(dimensions, final_activation=False, key=k_params)

    # Small batch: exercises the fused, grid-free single-tile kernel.
    x_small = jax.random.normal(k_small, (8, dimensions[0]), jnp.float32)
    y_small = jax.block_until_ready(cell(x_small))
    assert y_small.shape == (8, dimensions[-1])
    assert jnp.allclose(y_small, cell.reference(x_small), atol=1e-3, rtol=1e-3), \
        "small-batch mismatch vs reference"

    # Larger, non-tile-aligned batch: exercises the batch-tiled "parallel" grid
    # with adaptive tile size and VMEM-resident bf16 weights.
    x_big = jax.random.normal(k_big, (4100, dimensions[0]), jnp.float32)
    y_big = jax.block_until_ready(cell(x_big))
    assert y_big.shape == (4100, dimensions[-1])
    assert jnp.allclose(y_big, cell.reference(x_big), atol=1e-3, rtol=1e-3), \
        "large-batch mismatch vs reference"

    # Single 1-D sample (matches the PyTorch module's per-sample usage).
    x_one = jax.random.normal(k_one, (dimensions[0],), jnp.float32)
    y_one = jax.block_until_ready(cell(x_one))
    assert y_one.shape == (dimensions[-1],)
    assert jnp.allclose(y_one, cell.reference(x_one), atol=1e-3, rtol=1e-3), \
        "single-sample mismatch vs reference"

    print("KERNEL_OK")
</pallas_src>

<mosaic_0001>
module attributes {stable_mosaic.version = 11 : i64} {
  func.func @_fused_mlp_kernel(%arg0: memref<8x4xf32, #tpu.memory_space<vmem>>, %arg1: memref<4x32xbf16, #tpu.memory_space<vmem>>, %arg2: memref<32x32xbf16, #tpu.memory_space<vmem>>, %arg3: memref<32x8xbf16, #tpu.memory_space<vmem>>, %arg4: memref<3x32xf32, #tpu.memory_space<vmem>>, %arg5: memref<8x8xf32, #tpu.memory_space<vmem>>) attributes {dimension_semantics = [], scalar_prefetch = 0 : i64, scratch_operands = 0 : i64, tpu.core_type = #tpu.core_type<tc>} {
    %c0 = arith.constant 0 : index
    %c0_0 = arith.constant 0 : index
    %0 = vector.load %arg0[%c0, %c0_0] : memref<8x4xf32, #tpu.memory_space<vmem>>, vector<8x4xf32>
    %c0_1 = arith.constant 0 : index
    %c0_2 = arith.constant 0 : index
    %1 = vector.load %arg1[%c0_1, %c0_2] : memref<4x32xbf16, #tpu.memory_space<vmem>>, vector<4x32xbf16>
    %c0_3 = arith.constant 0 : index
    %c0_4 = arith.constant 0 : index
    %2 = vector.load %arg4[%c0_3, %c0_4] : memref<3x32xf32, #tpu.memory_space<vmem>>, vector<1x32xf32>
    %3 = arith.truncf %0 : vector<8x4xf32> to vector<8x4xbf16>
    %cst = arith.constant dense<0.000000e+00> : vector<8x32xf32>
    %4 = tpu.matmul %3, %1, %cst {dimension_numbers = #tpu.dot_dimension_numbers<[1], [0], [0], [1], [0, 0, 1, 1], [], []>} : vector<8x4xbf16>, vector<4x32xbf16>, vector<8x32xf32> -> vector<8x32xf32>
    %5 = vector.broadcast %2 : vector<1x32xf32> to vector<8x32xf32>
    %6 = arith.addf %4, %5 : vector<8x32xf32>
    %cst_5 = arith.constant 0.000000e+00 : f32
    %7 = vector.broadcast %cst_5 : f32 to vector<8x32xf32>
    %8 = arith.maximumf %6, %7 : vector<8x32xf32>
    %c0_6 = arith.constant 0 : index
    %c0_7 = arith.constant 0 : index
    %9 = vector.load %arg2[%c0_6, %c0_7] : memref<32x32xbf16, #tpu.memory_space<vmem>>, vector<32x32xbf16>
    %c1 = arith.constant 1 : index
    %c0_8 = arith.constant 0 : index
    %10 = vector.load %arg4[%c1, %c0_8] : memref<3x32xf32, #tpu.memory_space<vmem>>, vector<1x32xf32>
    %11 = arith.truncf %8 : vector<8x32xf32> to vector<8x32xbf16>
    %cst_9 = arith.constant dense<0.000000e+00> : vector<8x32xf32>
    %12 = tpu.matmul %11, %9, %cst_9 {dimension_numbers = #tpu.dot_dimension_numbers<[1], [0], [0], [1], [0, 0, 1, 1], [], []>} : vector<8x32xbf16>, vector<32x32xbf16>, vector<8x32xf32> -> vector<8x32xf32>
    %13 = vector.broadcast %10 : vector<1x32xf32> to vector<8x32xf32>
    %14 = arith.addf %12, %13 : vector<8x32xf32>
    %cst_10 = arith.constant 0.000000e+00 : f32
    %15 = vector.broadcast %cst_10 : f32 to vector<8x32xf32>
    %16 = arith.maximumf %14, %15 : vector<8x32xf32>
    %c0_11 = arith.constant 0 : index
    %c0_12 = arith.constant 0 : index
    %17 = vector.load %arg3[%c0_11, %c0_12] : memref<32x8xbf16, #tpu.memory_space<vmem>>, vector<32x8xbf16>
    %c2 = arith.constant 2 : index
    %c0_13 = arith.constant 0 : index
    %18 = vector.load %arg4[%c2, %c0_13] : memref<3x32xf32, #tpu.memory_space<vmem>>, vector<1x8xf32>
    %19 = arith.truncf %16 : vector<8x32xf32> to vector<8x32xbf16>
    %cst_14 = arith.constant dense<0.000000e+00> : vector<8x8xf32>
    %20 = tpu.matmul %19, %17, %cst_14 {dimension_numbers = #tpu.dot_dimension_numbers<[1], [0], [0], [1], [0, 0, 1, 1], [], []>} : vector<8x32xbf16>, vector<32x8xbf16>, vector<8x8xf32> -> vector<8x8xf32>
    %21 = vector.broadcast %18 : vector<1x8xf32> to vector<8x8xf32>
    %22 = arith.addf %20, %21 : vector<8x8xf32>
    %c0_15 = arith.constant 0 : index
    %c0_16 = arith.constant 0 : index
    %23 = vector.load %arg5[%c0_15, %c0_16] : memref<8x8xf32, #tpu.memory_space<vmem>>, vector<8x8xf32>
    tpu.vector_store %arg5[%c0_15, %c0_16], %22 {strides = array<i32>} : memref<8x8xf32, #tpu.memory_space<vmem>>, vector<8x8xf32>,
    return
  }
}

</mosaic_0001>

<llo_original>
// kernel: tpu_custom_call.1
$region0: #{tpu_custom_call.1}
  #allocation0 [shape = 'u32[]', space=smem, size = 0x4, offset = 0x4, fixed_abs, tag = 'smem constant byte address 0x4 - core index']
  #allocation1 [shape = 'u32[144,128]{1,0:T(1,128)}', space=vmem, size = 0x12000, scoped, tag = 'internal scratch']
  %s0 = inlined_call_operand.vmem [shape: f32[8,4], index: 0, kind: input, shape index: {}]
  %s1 = inlined_call_operand.vmem [shape: bf16[4,32], index: 1, kind: input, shape index: {}]
  %s2 = inlined_call_operand.vmem [shape: bf16[32,32], index: 2, kind: input, shape index: {}]
  %s3 = inlined_call_operand.vmem [shape: bf16[32,8], index: 3, kind: input, shape index: {}]
  %s4 = inlined_call_operand.vmem [shape: f32[3,32], index: 4, kind: input, shape index: {}]
  %s5 = inlined_call_operand.hbm [shape: f32[8,8], index: 5, kind: output, shape index: {}]
  %s6 = sld [smem:[#allocation0]]
  $region30: #{tpu_custom_call.1} parent=0
    _
  %s8 = ssub.s32 1, %s6
  %s9 = scalar_select 0, %s8, %s6
  $region1: #{tpu_custom_call.1} parent=0
    #allocation2 [shape = 'u8[4096]{0}', space=vmem, size = 0x1000, scoped, tag = 'output window, operand 0, single buffered']
    #allocation3 [shape = 's32[1]{0}', space=sflag, size = 0x4, scoped, tag = 'scoped memory for tpu_custom_call.1']
    %10 = vsyncpa [#allocation3], 0
    // Predicated region
    $region2: #{tpu_custom_call.1} parent=1 // pred_check
      _
    $region3: #{tpu_custom_call.1} parent=1 // pred_check_branch
      %12 = sbr.rel (0) target = $region5
    $region4: #{tpu_custom_call.1} parent=1 // pred_region
      _
    $region5: #{tpu_custom_call.1} parent=1 // pred_fallthru
      _
    // Predicated region
    $region6: #{tpu_custom_call.1} parent=1 // pred_check
      _
    $region7: #{tpu_custom_call.1} parent=1 // pred_check_branch
      %14 = sbr.rel (0) target = $region9
    $region8: #{tpu_custom_call.1} parent=1 // pred_region
      _
    $region9: #{tpu_custom_call.1} parent=1 // pred_fallthru
      _
    // Predicated region
    $region10: #{tpu_custom_call.1} parent=1 // pred_check
      _
    $region11: #{tpu_custom_call.1} parent=1 // pred_check_branch
      %16 = sbr.rel (0) target = $region13
    $region12: #{tpu_custom_call.1} parent=1 // pred_region
      _
    $region13: #{tpu_custom_call.1} parent=1 // pred_fallthru
      _
    // Predicated region
    $region14: #{tpu_custom_call.1} parent=1 // pred_check
      _
    $region15: #{tpu_custom_call.1} parent=1 // pred_check_branch
      %18 = sbr.rel (0) target = $region17
    $region16: #{tpu_custom_call.1} parent=1 // pred_region
      _
    $region17: #{tpu_custom_call.1} parent=1 // pred_fallthru
      _
    // Predicated region
    $region18: #{tpu_custom_call.1} parent=1 // pred_check
      _
    $region19: #{tpu_custom_call.1} parent=1 // pred_check_branch
      %20 = sbr.rel (0) target = $region21
    $region20: #{tpu_custom_call.1} parent=1 // pred_region
      _
    $region21: #{tpu_custom_call.1} parent=1 // pred_fallthru
      _
    %v22 = vld [vmem:[%s0] sm:$0xff]
    %v23 = vld [vmem:[%s1] sm:$0x3]
    %v24 = vld [vmem:[%s4] sm:$0x1]
    %v25 = vpack.c.bf16 %v22, %v22
    %v26 = vlaneseq
    %v27 = vshrl.u32 %v26, 7
    %v28 = vsub.s32 0, %v27
    %v29 = vrot.slane %v24, %v28
    %vm30 = vcmask 31744
    %v32 = vsel %vm30, %v25, 0
    %vm34 = vcmask 1041408
    %v36 = vsel %vm34, %v23, 0
    %38 = vmatprep.subr.bf16.mxu0 0
    %39 = vmatpush1.bf16.msra.mxu0 %v36
    %40 = vmatprep.subr.bf16.mxu0 0
    %41 = vmatpush1.bf16.msra.mxu0 0
    %42 = vmatprep.subr.bf16.mxu0 0
    %43 = vmatpush1.bf16.msra.mxu0 0
    %44 = vmatprep.subr.bf16.mxu0 0
    %45 = vmatpush1.bf16.msra.mxu0 0
    %46 = vmatprep.subr.bf16.mxu0 0
    %47 = vmatpush1.bf16.msra.mxu0 0
    %48 = vmatprep.subr.bf16.mxu0 0
    %49 = vmatpush1.bf16.msra.mxu0 0
    %50 = vmatprep.subr.bf16.mxu0 0
    %51 = vmatpush1.bf16.msra.mxu0 0
    %52 = vmatprep.subr.bf16.mxu0 0
    %53 = vmatpush1.bf16.msra.mxu0 0
    %54 = vmatprep.subr.bf16.mxu0 0
    %55 = vmatpush1.bf16.msra.mxu0 0
    %56 = vmatprep.subr.bf16.mxu0 0
    %57 = vmatpush1.bf16.msra.mxu0 0
    %58 = vmatprep.subr.bf16.mxu0 0
    %59 = vmatpush1.bf16.msra.mxu0 0
    %60 = vmatprep.subr.bf16.mxu0 0
    %61 = vmatpush1.bf16.msra.mxu0 0
    %62 = vmatprep.subr.bf16.mxu0 0
    %63 = vmatpush1.bf16.msra.mxu0 0
    %64 = vmatprep.subr.bf16.mxu0 0
    %65 = vmatpush1.bf16.msra.mxu0 0
    %66 = vmatprep.subr.bf16.mxu0 0
    %67 = vmatpush1.bf16.msra.mxu0 0
    %68 = vmatprep.subr.bf16.mxu0 0
    %69 = vmatpush1.bf16.msra.mxu0 0
    %70 = vmatprep.mubr.bf16.mxu0 0
    %71 = vmatmul.mubr.bf16.gmra.mrb[0].mxu0 %v32
    %v72 = vpop.f32.mrb[0].mxu0
    %v73 = vadd.f32 %v29, %v72
    %v74 = vpop.f32.mrb[0].mxu0
    %v75 = vpop.f32.mrb[0].mxu0
    %v76 = vpop.f32.mrb[0].mxu0
    %77 = vdwg.mxu0
    %v78 = vmax.f32 %v73, 0.0
    %v79 = vld [vmem:[%s2] sm:$0xf]
    %v80 = vld [vmem:[%s2 + $0x4] sm:$0xf]
    %v81 = vld [vmem:[%s2 + $0x8] sm:$0xf]
    %v82 = vld [vmem:[%s2 + $0xc] sm:$0xf]
    %v83 = vld [vmem:[%s4 + $0x1] sm:$0x1]
    %v84 = vpack.c.bf16 %v78, %v78
    %v85 = vlaneseq
    %v86 = vshrl.u32 %v85, 7
    %v87 = vsub.s32 0, %v86
    %v88 = vrot.slane %v83, %v87
    %v93 = vunpack.c.l.b16 %v79
    %v94 = vunpack.c.l.b16 %v80
    %v95 = vunpack.c.l.b16 %v81
    %v96 = vunpack.c.l.b16 %v82
    %v97 = vpack.c.b16 %v94, %v93
    %v98 = vpack.c.b16 %v96, %v95
    %vm101 = vcmask 261120
    %v103 = vsel %vm101, %v84, 0
    %105 = vmatprep.subr.bf16.mxu0 0
    %106 = vmatpush1.bf16.msra.mxu0 %v97
    %107 = vmatprep.subr.bf16.mxu0 0
    %108 = vmatpush1.bf16.msra.mxu0 %v98
    %109 = vmatprep.subr.bf16.mxu0 0
    %110 = vmatpush1.bf16.msra.mxu0 0
    %111 = vmatprep.subr.bf16.mxu0 0
    %112 = vmatpush1.bf16.msra.mxu0 0
    %113 = vmatprep.subr.bf16.mxu0 0
    %114 = vmatpush1.bf16.msra.mxu0 0
    %115 = vmatprep.subr.bf16.mxu0 0
    %116 = vmatpush1.bf16.msra.mxu0 0
    %117 = vmatprep.subr.bf16.mxu0 0
    %118 = vmatpush1.bf16.msra.mxu0 0
    %119 = vmatprep.subr.bf16.mxu0 0
    %120 = vmatpush1.bf16.msra.mxu0 0
    %121 = vmatprep.subr.bf16.mxu0 0
    %122 = vmatpush1.bf16.msra.mxu0 0
    %123 = vmatprep.subr.bf16.mxu0 0
    %124 = vmatpush1.bf16.msra.mxu0 0
    %125 = vmatprep.subr.bf16.mxu0 0
    %126 = vmatpush1.bf16.msra.mxu0 0
    %127 = vmatprep.subr.bf16.mxu0 0
    %128 = vmatpush1.bf16.msra.mxu0 0
    %129 = vmatprep.subr.bf16.mxu0 0
    %130 = vmatpush1.bf16.msra.mxu0 0
    %131 = vmatprep.subr.bf16.mxu0 0
    %132 = vmatpush1.bf16.msra.mxu0 0
    %133 = vmatprep.subr.bf16.mxu0 0
    %134 = vmatpush1.bf16.msra.mxu0 0
    %135 = vmatprep.subr.bf16.mxu0 0
    %136 = vmatpush1.bf16.msra.mxu0 0
    %137 = vmatprep.mubr.bf16.mxu0 0
    %138 = vmatmul.mubr.bf16.gmra.mrb[0].mxu0 %v103
    %v139 = vpop.f32.mrb[0].mxu0
    %v140 = vadd.f32 %v88, %v139
    %v141 = vpop.f32.mrb[0].mxu0
    %v142 = vpop.f32.mrb[0].mxu0
    %v143 = vpop.f32.mrb[0].mxu0
    %144 = vdwg.mxu0
    %v145 = vmax.f32 %v140, 0.0
    %v146 = vld [vmem:[%s3] sm:$0xf]
    %v147 = vld [vmem:[%s3 + $0x4] sm:$0xf]
    %v148 = vld [vmem:[%s3 + $0x8] sm:$0xf]
    %v149 = vld [vmem:[%s3 + $0xc] sm:$0xf]
    %v150 = vld [vmem:[%s4 + $0x2] sm:$0x1]
    %v151 = vpack.c.bf16 %v145, %v145
    %v152 = vlaneseq
    %v153 = vshrl.u32 %v152, 7
    %v154 = vsub.s32 0, %v153
    %v155 = vrot.slane %v150, %v154
    %v160 = vunpack.c.l.b16 %v146
    %v161 = vunpack.c.l.b16 %v147
    %v162 = vunpack.c.l.b16 %v148
    %v163 = vunpack.c.l.b16 %v149
    %v164 = vpack.c.b16 %v161, %v160
    %v165 = vpack.c.b16 %v163, %v162
    %v169 = vsel %vm101, %v151, 0
    %171 = vmatprep.subr.bf16.mxu0 0
    %172 = vmatpush1.bf16.msra.mxu0 %v164
    %173 = vmatprep.subr.bf16.mxu0 0
    %174 = vmatpush1.bf16.msra.mxu0 %v165
    %175 = vmatprep.subr.bf16.mxu0 0
    %176 = vmatpush1.bf16.msra.mxu0 0
    %177 = vmatprep.subr.bf16.mxu0 0
    %178 = vmatpush1.bf16.msra.mxu0 0
    %179 = vmatprep.subr.bf16.mxu0 0
    %180 = vmatpush1.bf16.msra.mxu0 0
    %181 = vmatprep.subr.bf16.mxu0 0
    %182 = vmatpush1.bf16.msra.mxu0 0
    %183 = vmatprep.subr.bf16.mxu0 0
    %184 = vmatpush1.bf16.msra.mxu0 0
    %185 = vmatprep.subr.bf16.mxu0 0
    %186 = vmatpush1.bf16.msra.mxu0 0
    %187 = vmatprep.subr.bf16.mxu0 0
    %188 = vmatpush1.bf16.msra.mxu0 0
    %189 = vmatprep.subr.bf16.mxu0 0
    %190 = vmatpush1.bf16.msra.mxu0 0
    %191 = vmatprep.subr.bf16.mxu0 0
    %192 = vmatpush1.bf16.msra.mxu0 0
    %193 = vmatprep.subr.bf16.mxu0 0
    %194 = vmatpush1.bf16.msra.mxu0 0
    %195 = vmatprep.subr.bf16.mxu0 0
    %196 = vmatpush1.bf16.msra.mxu0 0
    %197 = vmatprep.subr.bf16.mxu0 0
    %198 = vmatpush1.bf16.msra.mxu0 0
    %199 = vmatprep.subr.bf16.mxu0 0
    %200 = vmatpush1.bf16.msra.mxu0 0
    %201 = vmatprep.subr.bf16.mxu0 0
    %202 = vmatpush1.bf16.msra.mxu0 0
    %203 = vmatprep.mubr.bf16.mxu0 0
    %204 = vmatmul.mubr.bf16.gmra.mrb[0].mxu0 %v169
    %v205 = vpop.f32.mrb[0].mxu0
    %v206 = vadd.f32 %v155, %v205
    %v207 = vpop.f32.mrb[0].mxu0
    %v208 = vpop.f32.mrb[0].mxu0
    %v209 = vpop.f32.mrb[0].mxu0
    %210 = vdwg.mxu0
    %vm211 = vcmask 64512
    %212 = vst.msk [vmem:[#allocation2] sm:$0xff] %vm211, %v206
    // Predicated region
    $region22: #{tpu_custom_call.1} parent=1 // pred_check
      _
    $region23: #{tpu_custom_call.1} parent=1 // pred_check_branch
      %214 = sbr.rel (0) target = $region25
    $region24: #{tpu_custom_call.1} parent=1 // pred_region
      %s216 = ssub.s32 128, 128
      %217 = vsyncadd [#allocation3], %s216
      %s219 = sshll.u32 [#allocation2], 4
      %s220 = int_to_ptr.vmem [resolvable:$true] %s219
      %222 = dma.vmem_to_hbm [thread:$0]  %s220, 128, %s5, [#allocation3]
    $region25: #{tpu_custom_call.1} parent=1 // pred_fallthru
      _
    // Predicated region
    $region26: #{tpu_custom_call.1} parent=1 // pred_check
      _
    $region27: #{tpu_custom_call.1} parent=1 // pred_check_branch
      %224 = sbr.rel (0) target = $region29
    $region28: #{tpu_custom_call.1} parent=1 // pred_region
      %225 = dma.done [#allocation3], 128
    $region29: #{tpu_custom_call.1} parent=1 // pred_fallthru
      _
    %226 = vsyncpa [#allocation3], 1

</llo_original>
